<compile_context>
chip_gen: v5e
topology: v5e:2x2
jax: 0.10.0
libtpu: 0.0.40
codegen_flags: <defaults>
</compile_context>

<pallas_src>
import jax
import jax.numpy as jnp
from jax.experimental import pallas as pl
from jax.experimental.pallas import tpu as pltpu

_SUBLANE = 8     # f32/bf16 second-to-last-dim tiling unit for block shapes
_TB_MAX = 4096   # batch-tile cap (well under VMEM limits even on v7x)


def _round_up(x, m):
    return ((x + m - 1) // m) * m


def _actor_kernel(x_ref, w1_ref, b1_ref, w2_ref, b2_ref, w3_ref, b3_ref, means_ref):
    """3-layer MLP on one (tb, state_dim) row tile; weights stay VMEM-resident."""
    x = x_ref[...].astype(jnp.float32)           # bf16 HBM stream -> f32 compute

    # Layer 1: Linear(state_dim, 64) + tanh
    h1 = jnp.tanh(
        jnp.dot(x, w1_ref[...], preferred_element_type=jnp.float32) + b1_ref[...]
    )
    # Layer 2: Linear(64, 64) + tanh
    h2 = jnp.tanh(
        jnp.dot(h1, w2_ref[...], preferred_element_type=jnp.float32) + b2_ref[...]
    )
    # Layer 3: Linear(64, n_actions) -> means
    means = jnp.dot(h2, w3_ref[...], preferred_element_type=jnp.float32) + b3_ref[...]
    means_ref[...] = means.astype(means_ref.dtype)


@jax.jit
def actor_cont_forward(x, w1, b1, w2, b2, w3, b3, logstds):
    batch, state_dim = x.shape
    n_actions = w3.shape[1]

    # Batch tile: multiple of 8, capped at _TB_MAX; for batches > 8 rows pick
    # ~ceil(batch/2) so the grid has >= 2 steps (v7x megacore split).
    if batch <= _SUBLANE:
        tb = batch                                   # block == full array dim
    else:
        tb = min(_TB_MAX, _round_up(pl.cdiv(batch, 2), _SUBLANE))
    grid = (pl.cdiv(batch, tb),)

    # bf16 input stream halves HBM read traffic; in-kernel compute stays f32.
    x_bf16 = x.astype(jnp.bfloat16)

    # Row-blocked specs for the batch-scaled arrays; constant index_map keeps
    # the tiny (~21 KiB) weights resident in VMEM across all grid steps.
    row_in_spec = pl.BlockSpec((tb, state_dim), lambda i: (i, 0))
    row_out_spec = pl.BlockSpec((tb, n_actions), lambda i: (i, 0))
    const_spec = lambda arr: pl.BlockSpec(arr.shape, lambda i: (0, 0))

    means = pl.pallas_call(
        _actor_kernel,
        grid=grid,
        out_shape=jax.ShapeDtypeStruct((batch, n_actions), jnp.float32),
        in_specs=[
            row_in_spec,
            const_spec(w1), const_spec(b1),
            const_spec(w2), const_spec(b2),
            const_spec(w3), const_spec(b3),
        ],
        out_specs=row_out_spec,
        compiler_params=pltpu.CompilerParams(
            dimension_semantics=("parallel",),       # megacore split on v7x
        ),
    )(x_bf16, w1, b1, w2, b2, w3, b3)

    # stds is batch-independent: return the (n_actions,) vector un-broadcast
    # (torch.distributions.Normal(means, stds) would broadcast it anyway).
    stds = jnp.clip(jnp.exp(logstds), 0.001, 50.0)
    return means, stds


def init_params(key, state_dim, n_actions, hidden=64):
    """Deterministic init mirroring torch.nn.Linear default U(-1/sqrt(fan_in), +)."""
    ks = jax.random.split(key, 6)

    def linear(kw, kb, fan_in, fan_out):
        bound = 1.0 / jnp.sqrt(fan_in)
        w = jax.random.uniform(kw, (fan_in, fan_out), jnp.float32, -bound, bound)
        b = jax.random.uniform(kb, (1, fan_out), jnp.float32, -bound, bound)
        return w, b

    w1, b1 = linear(ks[0], ks[1], state_dim, hidden)
    w2, b2 = linear(ks[2], ks[3], hidden, hidden)
    w3, b3 = linear(ks[4], ks[5], hidden, n_actions)
    # nn.Parameter(torch.full((n_actions,), 0.1))
    logstds = jnp.full((n_actions,), 0.1, dtype=jnp.float32)
    return w1, b1, w2, b2, w3, b3, logstds


def reference_forward(x, w1, b1, w2, b2, w3, b3, logstds):
    h1 = jnp.tanh(x @ w1 + b1)
    h2 = jnp.tanh(h1 @ w2 + b2)
    means = h2 @ w3 + b3
    stds = jnp.clip(jnp.exp(logstds), 0.001, 50.0)
    return means, stds


if __name__ == "__main__":
    key = jax.random.PRNGKey(0)
    k_param, k_x1, k_x2 = jax.random.split(key, 3)

    state_dim, n_actions = 16, 4
    params = init_params(k_param, state_dim, n_actions)

    # Tolerances are relaxed vs. a pure-f32 path because x is streamed as bf16.
    ATOL, RTOL = 2e-2, 2e-2

    # Small batch (single grid step, block == full batch dim).
    x_small = jax.random.normal(k_x1, (8, state_dim), dtype=jnp.float32)
    means, stds = actor_cont_forward(x_small, *params)
    jax.block_until_ready((means, stds))
    ref_means, ref_stds = reference_forward(x_small, *params)
    assert means.shape == (8, n_actions) and stds.shape == (n_actions,)
    assert jnp.allclose(means, ref_means, atol=ATOL, rtol=RTOL)
    assert jnp.allclose(stds, ref_stds, atol=1e-6, rtol=1e-6)

    # Larger batch exercising the 2-step grid + ragged last block (no wrapper
    # pad / slice anymore).
    x_big = jax.random.normal(k_x2, (1037, state_dim), dtype=jnp.float32)
    means_b, stds_b = actor_cont_forward(x_big, *params)
    jax.block_until_ready((means_b, stds_b))
    ref_means_b, ref_stds_b = reference_forward(x_big, *params)
    assert means_b.shape == (1037, n_actions) and stds_b.shape == (n_actions,)
    assert jnp.allclose(means_b, ref_means_b, atol=ATOL, rtol=RTOL)
    assert jnp.allclose(stds_b, ref_stds_b, atol=1e-6, rtol=1e-6)

    # TODO(synk): torch.distributions.Normal has no Pallas equivalent; the kernel
    # returns its parameters (means, stds) instead.
    print("KERNEL_OK")
</pallas_src>

<mosaic_0001>
module attributes {stable_mosaic.version = 11 : i64} {
  func.func @_actor_kernel(%arg0: i32, %arg1: memref<8x16xbf16, #tpu.memory_space<vmem>>, %arg2: memref<16x64xf32, #tpu.memory_space<vmem>>, %arg3: memref<1x64xf32, #tpu.memory_space<vmem>>, %arg4: memref<64x64xf32, #tpu.memory_space<vmem>>, %arg5: memref<1x64xf32, #tpu.memory_space<vmem>>, %arg6: memref<64x4xf32, #tpu.memory_space<vmem>>, %arg7: memref<1x4xf32, #tpu.memory_space<vmem>>, %arg8: memref<8x4xf32, #tpu.memory_space<vmem>>) attributes {dimension_semantics = [#tpu.dimension_semantics<parallel>], iteration_bounds = array<i64: 1>, scalar_prefetch = 0 : i64, scratch_operands = 0 : i64, tpu.core_type = #tpu.core_type<tc>, window_params = [{transform_indices = @transform_0, window_bounds = array<i64: 8, 16>}, {pipeline_mode = #tpu.pipeline_mode<synchronous>, transform_indices = @transform_1, window_bounds = array<i64: 16, 64>}, {pipeline_mode = #tpu.pipeline_mode<synchronous>, transform_indices = @transform_2, window_bounds = array<i64: 1, 64>}, {pipeline_mode = #tpu.pipeline_mode<synchronous>, transform_indices = @transform_3, window_bounds = array<i64: 64, 64>}, {pipeline_mode = #tpu.pipeline_mode<synchronous>, transform_indices = @transform_4, window_bounds = array<i64: 1, 64>}, {pipeline_mode = #tpu.pipeline_mode<synchronous>, transform_indices = @transform_5, window_bounds = array<i64: 64, 4>}, {pipeline_mode = #tpu.pipeline_mode<synchronous>, transform_indices = @transform_6, window_bounds = array<i64: 1, 4>}, {transform_indices = @transform_7, window_bounds = array<i64: 8, 4>}]} {
    %c0 = arith.constant 0 : index
    %c0_0 = arith.constant 0 : index
    %0 = vector.load %arg1[%c0, %c0_0] : memref<8x16xbf16, #tpu.memory_space<vmem>>, vector<8x16xbf16>
    %1 = arith.extf %0 : vector<8x16xbf16> to vector<8x16xf32>
    %c0_1 = arith.constant 0 : index
    %c0_2 = arith.constant 0 : index
    %2 = vector.load %arg2[%c0_1, %c0_2] : memref<16x64xf32, #tpu.memory_space<vmem>>, vector<16x64xf32>
    %cst = arith.constant dense<0.000000e+00> : vector<8x64xf32>
    %3 = tpu.matmul %1, %2, %cst {dimension_numbers = #tpu.dot_dimension_numbers<[1], [0], [0], [1], [0, 0, 1, 1], [], []>} : vector<8x16xf32>, vector<16x64xf32>, vector<8x64xf32> -> vector<8x64xf32>
    %c0_3 = arith.constant 0 : index
    %c0_4 = arith.constant 0 : index
    %4 = vector.load %arg3[%c0_3, %c0_4] : memref<1x64xf32, #tpu.memory_space<vmem>>, vector<1x64xf32>
    %5 = vector.broadcast %4 : vector<1x64xf32> to vector<8x64xf32>
    %6 = arith.addf %3, %5 : vector<8x64xf32>
    %7 = math.tanh %6 : vector<8x64xf32>
    %c0_5 = arith.constant 0 : index
    %c0_6 = arith.constant 0 : index
    %8 = vector.load %arg4[%c0_5, %c0_6] : memref<64x64xf32, #tpu.memory_space<vmem>>, vector<64x64xf32>
    %cst_7 = arith.constant dense<0.000000e+00> : vector<8x64xf32>
    %9 = tpu.matmul %7, %8, %cst_7 {dimension_numbers = #tpu.dot_dimension_numbers<[1], [0], [0], [1], [0, 0, 1, 1], [], []>} : vector<8x64xf32>, vector<64x64xf32>, vector<8x64xf32> -> vector<8x64xf32>
    %c0_8 = arith.constant 0 : index
    %c0_9 = arith.constant 0 : index
    %10 = vector.load %arg5[%c0_8, %c0_9] : memref<1x64xf32, #tpu.memory_space<vmem>>, vector<1x64xf32>
    %11 = vector.broadcast %10 : vector<1x64xf32> to vector<8x64xf32>
    %12 = arith.addf %9, %11 : vector<8x64xf32>
    %13 = math.tanh %12 : vector<8x64xf32>
    %c0_10 = arith.constant 0 : index
    %c0_11 = arith.constant 0 : index
    %14 = vector.load %arg6[%c0_10, %c0_11] : memref<64x4xf32, #tpu.memory_space<vmem>>, vector<64x4xf32>
    %cst_12 = arith.constant dense<0.000000e+00> : vector<8x4xf32>
    %15 = tpu.matmul %13, %14, %cst_12 {dimension_numbers = #tpu.dot_dimension_numbers<[1], [0], [0], [1], [0, 0, 1, 1], [], []>} : vector<8x64xf32>, vector<64x4xf32>, vector<8x4xf32> -> vector<8x4xf32>
    %c0_13 = arith.constant 0 : index
    %c0_14 = arith.constant 0 : index
    %16 = vector.load %arg7[%c0_13, %c0_14] : memref<1x4xf32, #tpu.memory_space<vmem>>, vector<1x4xf32>
    %17 = vector.broadcast %16 : vector<1x4xf32> to vector<8x4xf32>
    %18 = arith.addf %15, %17 : vector<8x4xf32>
    %c0_15 = arith.constant 0 : index
    %c0_16 = arith.constant 0 : index
    %19 = vector.load %arg8[%c0_15, %c0_16] : memref<8x4xf32, #tpu.memory_space<vmem>>, vector<8x4xf32>
    tpu.vector_store %arg8[%c0_15, %c0_16], %18 {strides = array<i32>} : memref<8x4xf32, #tpu.memory_space<vmem>>, vector<8x4xf32>,
    return
  }
  func.func @transform_0(%arg0: i32) -> (i32, i32) {
    %c0_i32 = arith.constant 0 : i32
    %c0_i32_0 = arith.constant 0 : i32
    return %arg0, %c0_i32 : i32, i32
  }
  func.func @transform_1(%arg0: i32) -> (i32, i32) {
    %c0_i32 = arith.constant 0 : i32
    %c0_i32_0 = arith.constant 0 : i32
    %c0_i32_1 = arith.constant 0 : i32
    return %c0_i32, %c0_i32_0 : i32, i32
  }
  func.func @transform_2(%arg0: i32) -> (i32, i32) {
    %c0_i32 = arith.constant 0 : i32
    %c0_i32_0 = arith.constant 0 : i32
    %c0_i32_1 = arith.constant 0 : i32
    return %c0_i32, %c0_i32_0 : i32, i32
  }
  func.func @transform_3(%arg0: i32) -> (i32, i32) {
    %c0_i32 = arith.constant 0 : i32
    %c0_i32_0 = arith.constant 0 : i32
    %c0_i32_1 = arith.constant 0 : i32
    return %c0_i32, %c0_i32_0 : i32, i32
  }
  func.func @transform_4(%arg0: i32) -> (i32, i32) {
    %c0_i32 = arith.constant 0 : i32
    %c0_i32_0 = arith.constant 0 : i32
    %c0_i32_1 = arith.constant 0 : i32
    return %c0_i32, %c0_i32_0 : i32, i32
  }
  func.func @transform_5(%arg0: i32) -> (i32, i32) {
    %c0_i32 = arith.constant 0 : i32
    %c0_i32_0 = arith.constant 0 : i32
    %c0_i32_1 = arith.constant 0 : i32
    return %c0_i32, %c0_i32_0 : i32, i32
  }
  func.func @transform_6(%arg0: i32) -> (i32, i32) {
    %c0_i32 = arith.constant 0 : i32
    %c0_i32_0 = arith.constant 0 : i32
    %c0_i32_1 = arith.constant 0 : i32
    return %c0_i32, %c0_i32_0 : i32, i32
  }
  func.func @transform_7(%arg0: i32) -> (i32, i32) {
    %c0_i32 = arith.constant 0 : i32
    %c0_i32_0 = arith.constant 0 : i32
    return %arg0, %c0_i32 : i32, i32
  }
}

</mosaic_0001>

<llo_original>
// kernel: actor_cont_forward.1
$region0: #{actor_cont_forward.1}
  #allocation0 [shape = 'u32[]', space=smem, size = 0x4, offset = 0x4, fixed_abs, tag = 'smem constant byte address 0x4 - core index']
  #allocation1 [shape = 'u32[72,128]{1,0:T(1,128)}', space=vmem, size = 0x9000, scoped, tag = 'internal scratch']
  %s0 = inlined_call_operand.vmem [shape: bf16[8,16], index: 0, kind: input, shape index: {}]
  %s1 = inlined_call_operand.hbm [shape: f32[16,64], index: 1, kind: input, shape index: {}]
  %s2 = inlined_call_operand.vmem [shape: f32[1,64], index: 2, kind: input, shape index: {}]
  %s3 = inlined_call_operand.vmem [shape: f32[64,64], index: 3, kind: input, shape index: {}]
  %s4 = inlined_call_operand.vmem [shape: f32[1,64], index: 4, kind: input, shape index: {}]
  %s5 = inlined_call_operand.vmem [shape: f32[64,4], index: 5, kind: input, shape index: {}]
  %s6 = inlined_call_operand.vmem [shape: f32[1,4], index: 6, kind: input, shape index: {}]
  %s7 = inlined_call_operand.vmem [shape: f32[8,4], index: 7, kind: output, shape index: {}]
  %s8 = sld [smem:[#allocation0]]
  $region42: #{actor_cont_forward.1} parent=0
    _
  %s10 = ssub.s32 1, %s8
  %s11 = scalar_select 0, %s10, %s8
  $region1: #{actor_cont_forward.1} parent=0
    #allocation2 [shape = 'u8[8192]{0}', space=vmem, size = 0x2000, scoped, tag = 'input window, operand 1, single buffered']
    #allocation3 [shape = 's32[1]{0}', space=sflag, size = 0x4, scoped, tag = 'scoped memory for actor_cont_forward.1']
    %12 = vsyncpa [#allocation3], 0
    // Predicated region
    $region2: #{actor_cont_forward.1} parent=1 // pred_check
      _
    $region3: #{actor_cont_forward.1} parent=1 // pred_check_branch
      %14 = sbr.rel (0) target = $region5
    $region4: #{actor_cont_forward.1} parent=1 // pred_region
      _
    $region5: #{actor_cont_forward.1} parent=1 // pred_fallthru
      _
    // Predicated region
    $region6: #{actor_cont_forward.1} parent=1 // pred_check
      _
    $region7: #{actor_cont_forward.1} parent=1 // pred_check_branch
      %16 = sbr.rel (0) target = $region9
    $region8: #{actor_cont_forward.1} parent=1 // pred_region
      %18 = vsyncadd [#allocation3], 0
      %s19 = sshll.u32 %s1, 4
      %s20 = int_to_ptr.hbm [resolvable:$true] %s19
      %s21 = sshll.u32 [#allocation2], 4
      %s22 = int_to_ptr.vmem [resolvable:$true] %s21
      %27 = dma.hbm_to_vmem [thread:$0]  %s20, 256, %s22, [#allocation3], 128, 128, 8
    $region9: #{actor_cont_forward.1} parent=1 // pred_fallthru
      _
    // Predicated region
    $region10: #{actor_cont_forward.1} parent=1 // pred_check
      _
    $region11: #{actor_cont_forward.1} parent=1 // pred_check_branch
      %29 = sbr.rel (0) target = $region13
    $region12: #{actor_cont_forward.1} parent=1 // pred_region
      _
    $region13: #{actor_cont_forward.1} parent=1 // pred_fallthru
      _
    // Predicated region
    $region14: #{actor_cont_forward.1} parent=1 // pred_check
      _
    $region15: #{actor_cont_forward.1} parent=1 // pred_check_branch
      %31 = sbr.rel (0) target = $region17
    $region16: #{actor_cont_forward.1} parent=1 // pred_region
      _
    $region17: #{actor_cont_forward.1} parent=1 // pred_fallthru
      _
    // Predicated region
    $region18: #{actor_cont_forward.1} parent=1 // pred_check
      _
    $region19: #{actor_cont_forward.1} parent=1 // pred_check_branch
      %33 = sbr.rel (0) target = $region21
    $region20: #{actor_cont_forward.1} parent=1 // pred_region
      _
    $region21: #{actor_cont_forward.1} parent=1 // pred_fallthru
      _
    // Predicated region
    $region22: #{actor_cont_forward.1} parent=1 // pred_check
      _
    $region23: #{actor_cont_forward.1} parent=1 // pred_check_branch
      %35 = sbr.rel (0) target = $region25
    $region24: #{actor_cont_forward.1} parent=1 // pred_region
      _
    $region25: #{actor_cont_forward.1} parent=1 // pred_fallthru
      _
    // Predicated region
    $region26: #{actor_cont_forward.1} parent=1 // pred_check
      _
    $region27: #{actor_cont_forward.1} parent=1 // pred_check_branch
      %37 = sbr.rel (0) target = $region29
    $region28: #{actor_cont_forward.1} parent=1 // pred_region
      _
    $region29: #{actor_cont_forward.1} parent=1 // pred_fallthru
      _
    // Predicated region
    $region30: #{actor_cont_forward.1} parent=1 // pred_check
      _
    $region31: #{actor_cont_forward.1} parent=1 // pred_check_branch
      %39 = sbr.rel (0) target = $region33
    $region32: #{actor_cont_forward.1} parent=1 // pred_region
      %41 = dma.done [#allocation3], 256
    $region33: #{actor_cont_forward.1} parent=1 // pred_fallthru
      _
    %v42 = vld [vmem:[%s0] sm:$0xf]
    %v43 = vunpack.c.l.bf16 %v42
    %v44 = vld [vmem:[#allocation2] sm:$0xff]
    %v45 = vld [vmem:[#allocation2 + $0x8] sm:$0xff]
    %v46 = vld [vmem:[%s2] sm:$0x1]
    %v48 = vperm.slane %v46, 0
    %vm50 = vcmask 130048
    %v52 = vsel %vm50, %v43, 0
    %54 = vmatpush.msra.mxu0 0.0
    %55 = vmatpush.msra.mxu0 0.0
    %56 = vmatpush.msra.mxu0 0.0
    %57 = vmatpush.msra.mxu0 0.0
    %58 = vmatpush.msra.mxu0 0.0
    %59 = vmatpush.msra.mxu0 0.0
    %60 = vmatpush.msra.mxu0 0.0
    %61 = vmatpush.msra.mxu0 0.0
    %62 = vmatpush.msra.mxu0 0.0
    %63 = vmatpush.msra.mxu0 0.0
    %64 = vmatpush.msra.mxu0 0.0
    %65 = vmatpush.msra.mxu0 0.0
    %66 = vmatpush.msra.mxu0 0.0
    %67 = vmatpush.msra.mxu0 0.0
    %68 = vmatpush.msra.mxu0 %v45
    %69 = vmatpush.msra.mxu0 %v44
    %70 = vmatmul.f32.gmra.mxu0 %v52
    %v71 = vpop.f32.mrf.mxu0
    %v72 = vadd.f32 %v48, %v71
    %73 = vdwg.mxu0
    %v74 = vtanh.pop %v72
    %v75 = vld [vmem:[%s3] sm:$0xff]
    %v76 = vld [vmem:[%s3 + $0x8] sm:$0xff]
    %v77 = vld [vmem:[%s3 + $0x10] sm:$0xff]
    %v78 = vld [vmem:[%s3 + $0x18] sm:$0xff]
    %v79 = vld [vmem:[%s3 + $0x20] sm:$0xff]
    %v80 = vld [vmem:[%s3 + $0x28] sm:$0xff]
    %v81 = vld [vmem:[%s3 + $0x30] sm:$0xff]
    %v82 = vld [vmem:[%s3 + $0x38] sm:$0xff]
    %v83 = vld [vmem:[%s4] sm:$0x1]
    %v85 = vperm.slane %v83, 0
    %vm87 = vcmask 523264
    %v89 = vsel %vm87, %v74, 0
    %91 = vmatpush.msra.mxu0 0.0
    %92 = vmatpush.msra.mxu0 0.0
    %93 = vmatpush.msra.mxu0 0.0
    %94 = vmatpush.msra.mxu0 0.0
    %95 = vmatpush.msra.mxu0 0.0
    %96 = vmatpush.msra.mxu0 0.0
    %97 = vmatpush.msra.mxu0 0.0
    %98 = vmatpush.msra.mxu0 0.0
    %99 = vmatpush.msra.mxu0 %v82
    %100 = vmatpush.msra.mxu0 %v81
    %101 = vmatpush.msra.mxu0 %v80
    %102 = vmatpush.msra.mxu0 %v79
    %103 = vmatpush.msra.mxu0 %v78
    %104 = vmatpush.msra.mxu0 %v77
    %105 = vmatpush.msra.mxu0 %v76
    %106 = vmatpush.msra.mxu0 %v75
    %107 = vmatmul.f32.gmra.mxu0 %v89
    %v108 = vpop.f32.mrf.mxu0
    %v109 = vadd.f32 %v85, %v108
    %110 = vdwg.mxu0
    %v111 = vtanh.pop %v109
    %v112 = vld [vmem:[%s5] sm:$0xff]
    %v113 = vld [vmem:[%s5 + $0x8] sm:$0xff]
    %v114 = vld [vmem:[%s5 + $0x10] sm:$0xff]
    %v115 = vld [vmem:[%s5 + $0x18] sm:$0xff]
    %v116 = vld [vmem:[%s5 + $0x20] sm:$0xff]
    %v117 = vld [vmem:[%s5 + $0x28] sm:$0xff]
    %v118 = vld [vmem:[%s5 + $0x30] sm:$0xff]
    %v119 = vld [vmem:[%s5 + $0x38] sm:$0xff]
    %v120 = vld [vmem:[%s6] sm:$0x1]
    %v122 = vperm.slane %v120, 0
    %v125 = vsel %vm87, %v111, 0
    %127 = vmatpush.msra.mxu0 0.0
    %128 = vmatpush.msra.mxu0 0.0
    %129 = vmatpush.msra.mxu0 0.0
    %130 = vmatpush.msra.mxu0 0.0
    %131 = vmatpush.msra.mxu0 0.0
    %132 = vmatpush.msra.mxu0 0.0
    %133 = vmatpush.msra.mxu0 0.0
    %134 = vmatpush.msra.mxu0 0.0
    %135 = vmatpush.msra.mxu0 %v119
    %136 = vmatpush.msra.mxu0 %v118
    %137 = vmatpush.msra.mxu0 %v117
    %138 = vmatpush.msra.mxu0 %v116
    %139 = vmatpush.msra.mxu0 %v115
    %140 = vmatpush.msra.mxu0 %v114
    %141 = vmatpush.msra.mxu0 %v113
    %142 = vmatpush.msra.mxu0 %v112
    %143 = vmatmul.f32.gmra.mxu0 %v125
    %v144 = vpop.f32.mrf.mxu0
    %v145 = vadd.f32 %v122, %v144
    %146 = vdwg.mxu0
    %vm147 = vcmask 31744
    %148 = vst.msk [vmem:[%s7] sm:$0xff] %vm147, %v145
    // Predicated region
    $region34: #{actor_cont_forward.1} parent=1 // pred_check
      _
    $region35: #{actor_cont_forward.1} parent=1 // pred_check_branch
      %150 = sbr.rel (0) target = $region37
    $region36: #{actor_cont_forward.1} parent=1 // pred_region
      _
    $region37: #{actor_cont_forward.1} parent=1 // pred_fallthru
      _
    // Predicated region
    $region38: #{actor_cont_forward.1} parent=1 // pred_check
      _
    $region39: #{actor_cont_forward.1} parent=1 // pred_check_branch
      %152 = sbr.rel (0) target = $region41
    $region40: #{actor_cont_forward.1} parent=1 // pred_region
      _
    $region41: #{actor_cont_forward.1} parent=1 // pred_fallthru
      _
    %153 = vsyncpa [#allocation3], 1

</llo_original>
